<compile_context>
chip_gen: v5e
topology: v5e:2x2
jax: 0.10.0
libtpu: 0.0.40
codegen_flags: <defaults>
</compile_context>

<pallas_src>
import jax
import jax.numpy as jnp
from jax import lax
from jax.experimental import pallas as pl
from jax.experimental.pallas import tpu as pltpu


def _round_up(v, m):
    return ((v + m - 1) // m) * m


def base_recurrent_kernel(x_ref, w_ih_t_ref, w_hh_t_ref, b_ref, w_f_ref,
                          b_f_ref, logits_ref, h_ref, seq_ref):
    """One sequence chunk per grid step (grid axis is 'arbitrary' / serial).

    x_ref      : (C, I)   chunk of the last-batch-row input sequence (VMEM)
    w_ih_t_ref : (I, Hp)  input->hidden weight, pre-transposed, H padded to Hp
    w_hh_t_ref : (Hp, Hp) hidden->hidden weight, pre-transposed, padded
    b_ref      : (1, Hp)  b_ih + b_hh, padded
    w_f_ref    : (1, Hp)  final linear weight row, padded
    b_f_ref    : (1, 1)   final linear bias (SMEM)
    logits_ref : (1, C)   lane-dense chunk of sigmoid(Linear(h_t))
    h_ref      : (1, Hp)  VMEM carry: hidden state across chunks
    seq_ref    : (C, Hp)  VMEM scratch: holds xW rows, overwritten with h_t rows
    """
    chunk, hp = seq_ref.shape

    @pl.when(pl.program_id(0) == 0)
    def _():
        h_ref[...] = jnp.zeros_like(h_ref)

    # Hoisted input projection + bias for the whole chunk (off the serial path).
    seq_ref[...] = (
        jnp.dot(x_ref[...], w_ih_t_ref[...], preferred_element_type=jnp.float32)
        + b_ref[...])

    # W_hh fits in 16 vregs at Hp=128 -> hoist once; for larger H feed the dot
    # from the ref so the full matrix is not pinned live across the whole loop.
    if hp <= 128:
        w_hh_t_hoisted = w_hh_t_ref[...]
        read_w_hh = lambda: w_hh_t_hoisted
    else:
        read_w_hh = lambda: w_hh_t_ref[...]

    n_tiles = chunk // 8

    def tile_body(tile, h):
        start = pl.multiple_of(tile * 8, 8)
        xw = seq_ref[pl.ds(start, 8), :]              # dense (8, Hp) load
        rows = []
        for j in range(8):                            # static 8-step unroll
            pre = xw[j:j + 1, :] + jnp.dot(
                h, read_w_hh(), preferred_element_type=jnp.float32)
            h = jnp.tanh(pre)                         # (1, Hp) serial chain
            rows.append(h)
        seq_ref[pl.ds(start, 8), :] = jnp.concatenate(rows, axis=0)  # dense store
        return h

    h_last = lax.fori_loop(0, n_tiles, tile_body, h_ref[...])
    h_ref[...] = h_last                               # carry into the next chunk

    # Dropout: eval-mode identity.  Final Linear(H -> 1) + Sigmoid, laid out as a
    # lane-dense (1, C) row: contract Hp of (1, Hp) x (C, Hp).
    z = lax.dot_general(
        w_f_ref[...], seq_ref[...],
        dimension_numbers=(((1,), (1,)), ((), ())),
        preferred_element_type=jnp.float32) + b_f_ref[0, 0]
    logits_ref[...] = jax.nn.sigmoid(z)


def prepare_params(params):
    """One-time weight prep (pad H to a lane multiple, pre-transpose, fold biases).

    Call once and reuse across forward calls so the pad/transpose never sits on
    the per-call path.
    """
    h = params["w_hh"].shape[0]
    hp = _round_up(h, 128)
    pad = hp - h
    return {
        "w_ih_t": jnp.pad(params["w_ih"].T, ((0, 0), (0, pad))),           # (I, Hp)
        "w_hh_t": jnp.pad(params["w_hh"].T, ((0, pad), (0, pad))),         # (Hp, Hp)
        "b": jnp.pad((params["b_ih"] + params["b_hh"]).reshape(1, h),
                     ((0, 0), (0, pad))),                                   # (1, Hp)
        "w_f_row": jnp.pad(params["w_f"], ((0, 0), (0, pad))),             # (1, Hp)
        "b_f": params["b_f"].reshape(1, 1),                                # (1, 1)
    }


def _chunk_target():
    """Per-generation chunk length: bigger chunks on 128 MiB-VMEM chips (v5e/v6e)."""
    try:
        vmem_cap = pltpu.get_tpu_info().vmem_capacity_bytes
    except Exception:
        vmem_cap = 64 * 1024 * 1024
    return 1024 if vmem_cap >= 100 * 1024 * 1024 else 512


def base_recurrent_forward(x, prepped, chunk_target=None):
    """x: (L, N, I) float32, prepped = prepare_params(params).  Returns (L, 1)."""
    L, N, I = x.shape
    hp = prepped["w_hh_t"].shape[0]

    # Only the last batch row feeds out[:, -1, :]; batch rows are independent
    # (h0 = 0), so drop the rest before the kernel.
    x_last = x[:, N - 1, :]                                                 # (L, I)

    # Chunk the sequence: single chunk for small L, lane-aligned chunk otherwise.
    if chunk_target is None:
        chunk_target = _chunk_target()
    l8 = _round_up(L, 8)
    chunk = l8 if l8 <= chunk_target else chunk_target     # mult of 8 (128 if >1 chunk)
    lp = _round_up(l8, chunk)
    num_chunks = lp // chunk
    # Zero-padded trailing timesteps are inert: they only run after the last
    # valid output and their logits are sliced off below.
    x_pad = jnp.pad(x_last, ((0, lp - L), (0, 0)))

    # Explicit scoped-VMEM budget: double-buffered chunk tiles + weights + scratch.
    est = 4 * (2 * chunk * I + 2 * chunk + chunk * hp
               + I * hp + hp * hp + 2 * hp + hp)
    vmem_limit = int(min(max(4 * est, 16 * 1024 * 1024), 100 * 1024 * 1024))

    out = pl.pallas_call(
        base_recurrent_kernel,
        out_shape=jax.ShapeDtypeStruct((1, lp), jnp.float32),
        grid_spec=pltpu.PrefetchScalarGridSpec(
            num_scalar_prefetch=0,
            grid=(num_chunks,),
            in_specs=[
                pl.BlockSpec((chunk, I), lambda c: (c, 0)),                 # x chunk
                pl.BlockSpec((I, hp), lambda c: (0, 0)),                    # W_ih^T
                pl.BlockSpec((hp, hp), lambda c: (0, 0)),                   # W_hh^T
                pl.BlockSpec((1, hp), lambda c: (0, 0)),                    # b_ih+b_hh
                pl.BlockSpec((1, hp), lambda c: (0, 0)),                    # w_f row
                pl.BlockSpec(memory_space=pltpu.MemorySpace.SMEM),          # b_f
            ],
            out_specs=pl.BlockSpec((1, chunk), lambda c: (0, c)),           # lane-dense
            scratch_shapes=[
                pltpu.VMEM((1, hp), jnp.float32),                           # h carry
                pltpu.VMEM((chunk, hp), jnp.float32),                       # xW / h_t
            ]),
        compiler_params=pltpu.CompilerParams(
            dimension_semantics=("arbitrary",),                             # serial
            vmem_limit_bytes=vmem_limit),
    )(x_pad, prepped["w_ih_t"], prepped["w_hh_t"], prepped["b"],
      prepped["w_f_row"], prepped["b_f"])

    return out[0, :L].reshape(L, 1)


def reference_forward(x, params):
    """Pure-JAX reference mirroring the PyTorch module (eval mode)."""
    L, N, I = x.shape
    H = params["w_hh"].shape[0]

    def step(h, x_t):
        h_new = jnp.tanh(x_t @ params["w_ih"].T + h @ params["w_hh"].T
                         + params["b_ih"] + params["b_hh"])
        return h_new, h_new

    h0 = jnp.zeros((N, H), jnp.float32)
    _, outs = lax.scan(step, h0, x)                  # (L, N, H)
    out_last = outs[:, -1, :]                        # (L, H)
    z = out_last @ params["w_f"].T + params["b_f"]   # (L, 1)
    return jax.nn.sigmoid(z)


def init_params(key, input_size, h_size):
    """Deterministic init mimicking PyTorch's U(-1/sqrt(H), 1/sqrt(H))."""
    ks = jax.random.split(key, 6)
    s = 1.0 / jnp.sqrt(h_size)
    u = lambda k, shape: jax.random.uniform(k, shape, jnp.float32, -s, s)
    return {
        "w_ih": u(ks[0], (h_size, input_size)),   # RNN weight_ih_l0
        "w_hh": u(ks[1], (h_size, h_size)),       # RNN weight_hh_l0
        "b_ih": u(ks[2], (h_size,)),              # RNN bias_ih_l0
        "b_hh": u(ks[3], (h_size,)),              # RNN bias_hh_l0
        "w_f": u(ks[4], (1, h_size)),             # final Linear weight
        "b_f": u(ks[5], (1,)),                    # final Linear bias
    }


if __name__ == "__main__":
    input_size, h_size, dropout = 4, 32, 0.2
    L, N = 8, 2  # seq len, batch

    key = jax.random.PRNGKey(0)
    kx, kp = jax.random.split(key)
    x = jax.random.normal(kx, (L, N, input_size), dtype=jnp.float32)
    params = init_params(kp, input_size, h_size)
    prepped = prepare_params(params)   # one-time weight prep, reused per call

    logits = jax.block_until_ready(base_recurrent_forward(x, prepped))
    ref = jax.block_until_ready(reference_forward(x, params))

    assert logits.shape == (L, 1)
    assert bool(jnp.all(jnp.isfinite(logits)))
    assert bool(jnp.all((logits >= 0.0) & (logits <= 1.0)))
    assert bool(jnp.allclose(logits, ref, atol=1e-5, rtol=1e-5))
    print("KERNEL_OK")
</pallas_src>

<mosaic_0001>
module attributes {stable_mosaic.version = 11 : i64} {
  func.func @base_recurrent_kernel(%arg0: i32, %arg1: memref<8x4xf32, #tpu.memory_space<vmem>>, %arg2: memref<4x128xf32, #tpu.memory_space<vmem>>, %arg3: memref<128x128xf32, #tpu.memory_space<vmem>>, %arg4: memref<1x128xf32, #tpu.memory_space<vmem>>, %arg5: memref<1x128xf32, #tpu.memory_space<vmem>>, %arg6: memref<1x1xf32, #tpu.memory_space<smem>>, %arg7: memref<1x8xf32, #tpu.memory_space<vmem>>, %arg8: memref<1x128xf32, #tpu.memory_space<vmem>>, %arg9: memref<8x128xf32, #tpu.memory_space<vmem>>) attributes {dimension_semantics = [#tpu.dimension_semantics<arbitrary>], iteration_bounds = array<i64: 1>, scalar_prefetch = 0 : i64, scratch_operands = 2 : i64, tpu.core_type = #tpu.core_type<tc>, window_params = [{transform_indices = @transform_0, window_bounds = array<i64: 8, 4>}, {pipeline_mode = #tpu.pipeline_mode<synchronous>, transform_indices = @transform_1, window_bounds = array<i64: 4, 128>}, {pipeline_mode = #tpu.pipeline_mode<synchronous>, transform_indices = @transform_2, window_bounds = array<i64: 128, 128>}, {pipeline_mode = #tpu.pipeline_mode<synchronous>, transform_indices = @transform_3, window_bounds = array<i64: 1, 128>}, {pipeline_mode = #tpu.pipeline_mode<synchronous>, transform_indices = @transform_4, window_bounds = array<i64: 1, 128>}, {transform_indices = @transform_5, window_bounds = array<i64: 1, 1>}, {transform_indices = @transform_6, window_bounds = array<i64: 1, 8>}]} {
    %c0_i32 = arith.constant 0 : i32
    %0 = arith.cmpi eq, %arg0, %c0_i32 : i32
    %1 = arith.extui %0 : i1 to i32
    %c0_i32_0 = arith.constant 0 : i32
    %2 = arith.cmpi ne, %1, %c0_i32_0 : i32
    scf.if %2 {
      %cst_35 = arith.constant 0.000000e+00 : f32
      %64 = vector.broadcast %cst_35 : f32 to vector<1x128xf32>
      %c0_36 = arith.constant 0 : index
      %c0_37 = arith.constant 0 : index
      %65 = vector.load %arg8[%c0_36, %c0_37] : memref<1x128xf32, #tpu.memory_space<vmem>>, vector<1x128xf32>
      tpu.vector_store %arg8[%c0_36, %c0_37], %64 {strides = array<i32>} : memref<1x128xf32, #tpu.memory_space<vmem>>, vector<1x128xf32>,
    } else {
    }
    %c0 = arith.constant 0 : index
    %c0_1 = arith.constant 0 : index
    %3 = vector.load %arg1[%c0, %c0_1] : memref<8x4xf32, #tpu.memory_space<vmem>>, vector<8x4xf32>
    %c0_2 = arith.constant 0 : index
    %c0_3 = arith.constant 0 : index
    %4 = vector.load %arg2[%c0_2, %c0_3] : memref<4x128xf32, #tpu.memory_space<vmem>>, vector<4x128xf32>
    %cst = arith.constant dense<0.000000e+00> : vector<8x128xf32>
    %5 = tpu.matmul %3, %4, %cst {dimension_numbers = #tpu.dot_dimension_numbers<[1], [0], [0], [1], [0, 0, 1, 1], [], []>} : vector<8x4xf32>, vector<4x128xf32>, vector<8x128xf32> -> vector<8x128xf32>
    %c0_4 = arith.constant 0 : index
    %c0_5 = arith.constant 0 : index
    %6 = vector.load %arg4[%c0_4, %c0_5] : memref<1x128xf32, #tpu.memory_space<vmem>>, vector<1x128xf32>
    %7 = vector.broadcast %6 : vector<1x128xf32> to vector<8x128xf32>
    %8 = arith.addf %5, %7 : vector<8x128xf32>
    %c0_6 = arith.constant 0 : index
    %c0_7 = arith.constant 0 : index
    %9 = vector.load %arg9[%c0_6, %c0_7] : memref<8x128xf32, #tpu.memory_space<vmem>>, vector<8x128xf32>
    tpu.vector_store %arg9[%c0_6, %c0_7], %8 {strides = array<i32>} : memref<8x128xf32, #tpu.memory_space<vmem>>, vector<8x128xf32>,
    %c0_8 = arith.constant 0 : index
    %c0_9 = arith.constant 0 : index
    %10 = vector.load %arg3[%c0_8, %c0_9] : memref<128x128xf32, #tpu.memory_space<vmem>>, vector<128x128xf32>
    %c0_10 = arith.constant 0 : index
    %c0_11 = arith.constant 0 : index
    %11 = vector.load %arg8[%c0_10, %c0_11] : memref<1x128xf32, #tpu.memory_space<vmem>>, vector<1x128xf32>
    %c0_i32_12 = arith.constant 0 : i32
    %c8_i32 = arith.constant 8 : i32
    %12 = arith.muli %c0_i32_12, %c8_i32 : i32
    %13 = tpu.assume_multiple %12, 8 : i32
    %14 = arith.index_cast %13 : i32 to index
    %c0_13 = arith.constant 0 : index
    %15 = vector.load %arg9[%14, %c0_13] : memref<8x128xf32, #tpu.memory_space<vmem>>, vector<8x128xf32>
    %16 = vector.extract_strided_slice %15 {offsets = [0, 0], sizes = [1, 128], strides = [1, 1]} : vector<8x128xf32> to vector<1x128xf32>
    %cst_14 = arith.constant dense<0.000000e+00> : vector<1x128xf32>
    %17 = tpu.matmul %11, %10, %cst_14 {dimension_numbers = #tpu.dot_dimension_numbers<[1], [0], [0], [1], [0, 0, 1, 1], [], []>} : vector<1x128xf32>, vector<128x128xf32>, vector<1x128xf32> -> vector<1x128xf32>
    %18 = arith.addf %16, %17 : vector<1x128xf32>
    %19 = math.tanh %18 : vector<1x128xf32>
    %20 = vector.extract_strided_slice %15 {offsets = [1, 0], sizes = [1, 128], strides = [1, 1]} : vector<8x128xf32> to vector<1x128xf32>
    %cst_15 = arith.constant dense<0.000000e+00> : vector<1x128xf32>
    %21 = tpu.matmul %19, %10, %cst_15 {dimension_numbers = #tpu.dot_dimension_numbers<[1], [0], [0], [1], [0, 0, 1, 1], [], []>} : vector<1x128xf32>, vector<128x128xf32>, vector<1x128xf32> -> vector<1x128xf32>
    %22 = arith.addf %20, %21 : vector<1x128xf32>
    %23 = math.tanh %22 : vector<1x128xf32>
    %24 = vector.extract_strided_slice %15 {offsets = [2, 0], sizes = [1, 128], strides = [1, 1]} : vector<8x128xf32> to vector<1x128xf32>
    %cst_16 = arith.constant dense<0.000000e+00> : vector<1x128xf32>
    %25 = tpu.matmul %23, %10, %cst_16 {dimension_numbers = #tpu.dot_dimension_numbers<[1], [0], [0], [1], [0, 0, 1, 1], [], []>} : vector<1x128xf32>, vector<128x128xf32>, vector<1x128xf32> -> vector<1x128xf32>
    %26 = arith.addf %24, %25 : vector<1x128xf32>
    %27 = math.tanh %26 : vector<1x128xf32>
    %28 = vector.extract_strided_slice %15 {offsets = [3, 0], sizes = [1, 128], strides = [1, 1]} : vector<8x128xf32> to vector<1x128xf32>
    %cst_17 = arith.constant dense<0.000000e+00> : vector<1x128xf32>
    %29 = tpu.matmul %27, %10, %cst_17 {dimension_numbers = #tpu.dot_dimension_numbers<[1], [0], [0], [1], [0, 0, 1, 1], [], []>} : vector<1x128xf32>, vector<128x128xf32>, vector<1x128xf32> -> vector<1x128xf32>
    %30 = arith.addf %28, %29 : vector<1x128xf32>
    %31 = math.tanh %30 : vector<1x128xf32>
    %32 = vector.extract_strided_slice %15 {offsets = [4, 0], sizes = [1, 128], strides = [1, 1]} : vector<8x128xf32> to vector<1x128xf32>
    %cst_18 = arith.constant dense<0.000000e+00> : vector<1x128xf32>
    %33 = tpu.matmul %31, %10, %cst_18 {dimension_numbers = #tpu.dot_dimension_numbers<[1], [0], [0], [1], [0, 0, 1, 1], [], []>} : vector<1x128xf32>, vector<128x128xf32>, vector<1x128xf32> -> vector<1x128xf32>
    %34 = arith.addf %32, %33 : vector<1x128xf32>
    %35 = math.tanh %34 : vector<1x128xf32>
    %36 = vector.extract_strided_slice %15 {offsets = [5, 0], sizes = [1, 128], strides = [1, 1]} : vector<8x128xf32> to vector<1x128xf32>
    %cst_19 = arith.constant dense<0.000000e+00> : vector<1x128xf32>
    %37 = tpu.matmul %35, %10, %cst_19 {dimension_numbers = #tpu.dot_dimension_numbers<[1], [0], [0], [1], [0, 0, 1, 1], [], []>} : vector<1x128xf32>, vector<128x128xf32>, vector<1x128xf32> -> vector<1x128xf32>
    %38 = arith.addf %36, %37 : vector<1x128xf32>
    %39 = math.tanh %38 : vector<1x128xf32>
    %40 = vector.extract_strided_slice %15 {offsets = [6, 0], sizes = [1, 128], strides = [1, 1]} : vector<8x128xf32> to vector<1x128xf32>
    %cst_20 = arith.constant dense<0.000000e+00> : vector<1x128xf32>
    %41 = tpu.matmul %39, %10, %cst_20 {dimension_numbers = #tpu.dot_dimension_numbers<[1], [0], [0], [1], [0, 0, 1, 1], [], []>} : vector<1x128xf32>, vector<128x128xf32>, vector<1x128xf32> -> vector<1x128xf32>
    %42 = arith.addf %40, %41 : vector<1x128xf32>
    %43 = math.tanh %42 : vector<1x128xf32>
    %44 = vector.extract_strided_slice %15 {offsets = [7, 0], sizes = [1, 128], strides = [1, 1]} : vector<8x128xf32> to vector<1x128xf32>
    %cst_21 = arith.constant dense<0.000000e+00> : vector<1x128xf32>
    %45 = tpu.matmul %43, %10, %cst_21 {dimension_numbers = #tpu.dot_dimension_numbers<[1], [0], [0], [1], [0, 0, 1, 1], [], []>} : vector<1x128xf32>, vector<128x128xf32>, vector<1x128xf32> -> vector<1x128xf32>
    %46 = arith.addf %44, %45 : vector<1x128xf32>
    %47 = math.tanh %46 : vector<1x128xf32>
    %48 = tpu.concatenate %19, %23, %27, %31, %35, %39, %43, %47 in 0 : vector<1x128xf32>, vector<1x128xf32>, vector<1x128xf32>, vector<1x128xf32>, vector<1x128xf32>, vector<1x128xf32>, vector<1x128xf32>, vector<1x128xf32> -> vector<8x128xf32>
    %49 = arith.index_cast %13 : i32 to index
    %c0_22 = arith.constant 0 : index
    %50 = vector.load %arg9[%49, %c0_22] : memref<8x128xf32, #tpu.memory_space<vmem>>, vector<8x128xf32>
    tpu.vector_store %arg9[%49, %c0_22], %48 {strides = array<i32>} : memref<8x128xf32, #tpu.memory_space<vmem>>, vector<8x128xf32>,
    %c1_i32 = arith.constant 1 : i32
    %c0_23 = arith.constant 0 : index
    %c0_24 = arith.constant 0 : index
    %51 = vector.load %arg8[%c0_23, %c0_24] : memref<1x128xf32, #tpu.memory_space<vmem>>, vector<1x128xf32>
    tpu.vector_store %arg8[%c0_23, %c0_24], %47 {strides = array<i32>} : memref<1x128xf32, #tpu.memory_space<vmem>>, vector<1x128xf32>,
    %c0_25 = arith.constant 0 : index
    %c0_26 = arith.constant 0 : index
    %52 = vector.load %arg5[%c0_25, %c0_26] : memref<1x128xf32, #tpu.memory_space<vmem>>, vector<1x128xf32>
    %c0_27 = arith.constant 0 : index
    %c0_28 = arith.constant 0 : index
    %53 = vector.load %arg9[%c0_27, %c0_28] : memref<8x128xf32, #tpu.memory_space<vmem>>, vector<8x128xf32>
    %cst_29 = arith.constant dense<0.000000e+00> : vector<1x8xf32>
    %54 = tpu.matmul %52, %53, %cst_29 {dimension_numbers = #tpu.dot_dimension_numbers<[1], [1], [0], [0], [0, 0, 1, 0], [], []>} : vector<1x128xf32>, vector<8x128xf32>, vector<1x8xf32> -> vector<1x8xf32>
    %c0_30 = arith.constant 0 : index
    %c0_31 = arith.constant 0 : index
    %55 = memref.load %arg6[%c0_30, %c0_31] : memref<1x1xf32, #tpu.memory_space<smem>>
    %56 = vector.broadcast %55 : f32 to vector<1x8xf32>
    %57 = arith.addf %54, %56 : vector<1x8xf32>
    %58 = arith.negf %57 : vector<1x8xf32>
    %59 = math.exp %58 : vector<1x8xf32>
    %cst_32 = arith.constant 1.000000e+00 : f32
    %60 = vector.broadcast %cst_32 : f32 to vector<1x8xf32>
    %61 = arith.addf %60, %59 : vector<1x8xf32>
    %62 = arith.divf %60, %61 : vector<1x8xf32>
    %c0_33 = arith.constant 0 : index
    %c0_34 = arith.constant 0 : index
    %63 = vector.load %arg7[%c0_33, %c0_34] : memref<1x8xf32, #tpu.memory_space<vmem>>, vector<1x8xf32>
    tpu.vector_store %arg7[%c0_33, %c0_34], %62 {strides = array<i32>} : memref<1x8xf32, #tpu.memory_space<vmem>>, vector<1x8xf32>,
    return
  }
  func.func @transform_0(%arg0: i32) -> (i32, i32) {
    %c0_i32 = arith.constant 0 : i32
    %c0_i32_0 = arith.constant 0 : i32
    return %arg0, %c0_i32 : i32, i32
  }
  func.func @transform_1(%arg0: i32) -> (i32, i32) {
    %c0_i32 = arith.constant 0 : i32
    %c0_i32_0 = arith.constant 0 : i32
    %c0_i32_1 = arith.constant 0 : i32
    return %c0_i32, %c0_i32_0 : i32, i32
  }
  func.func @transform_2(%arg0: i32) -> (i32, i32) {
    %c0_i32 = arith.constant 0 : i32
    %c0_i32_0 = arith.constant 0 : i32
    %c0_i32_1 = arith.constant 0 : i32
    return %c0_i32, %c0_i32_0 : i32, i32
  }
  func.func @transform_3(%arg0: i32) -> (i32, i32) {
    %c0_i32 = arith.constant 0 : i32
    %c0_i32_0 = arith.constant 0 : i32
    %c0_i32_1 = arith.constant 0 : i32
    return %c0_i32, %c0_i32_0 : i32, i32
  }
  func.func @transform_4(%arg0: i32) -> (i32, i32) {
    %c0_i32 = arith.constant 0 : i32
    %c0_i32_0 = arith.constant 0 : i32
    %c0_i32_1 = arith.constant 0 : i32
    return %c0_i32, %c0_i32_0 : i32, i32
  }
  func.func @transform_5(%arg0: i32) -> (i32, i32) {
    %c0_i32 = arith.constant 0 : i32
    %c0_i32_0 = arith.constant 0 : i32
    %c0_i32_1 = arith.constant 0 : i32
    return %c0_i32, %c0_i32_0 : i32, i32
  }
  func.func @transform_6(%arg0: i32) -> (i32, i32) {
    %c0_i32 = arith.constant 0 : i32
    %c0_i32_0 = arith.constant 0 : i32
    return %c0_i32, %arg0 : i32, i32
  }
}

</mosaic_0001>

<llo_original>
// kernel: tpu_custom_call.1
$region0: #{tpu_custom_call.1}
  #allocation0 [shape = 'u32[]', space=smem, size = 0x4, offset = 0x4, fixed_abs, tag = 'smem constant byte address 0x4 - core index']
  #allocation1 [shape = 'u32[72,128]{1,0:T(1,128)}', space=vmem, size = 0x9000, scoped, tag = 'internal scratch']
  #allocation2 [shape = 'f32[1,128]{1,0:T(1,128)}', space=vmem, size = 0x200, scoped, tag = 'scratch operand']
  #allocation3 [shape = 'f32[8,128]{1,0:T(8,128)}', space=vmem, size = 0x1000, scoped, tag = 'scratch operand']
  #allocation4 [shape = 'f32[1,1]{1,0:T(1,128)S(6)}', space=smem, size = 0x200, scoped, tag = 'scoped memory for tpu_custom_call.1']
  %s0 = inlined_call_operand.vmem [shape: f32[8,4], index: 0, kind: input, shape index: {}]
  %s1 = inlined_call_operand.vmem [shape: f32[4,128], index: 1, kind: input, shape index: {}]
  %s2 = inlined_call_operand.hbm [shape: f32[128,128], index: 2, kind: input, shape index: {}]
  %s3 = inlined_call_operand.vmem [shape: f32[1,128], index: 3, kind: input, shape index: {}]
  %s4 = inlined_call_operand.vmem [shape: f32[1,128], index: 4, kind: input, shape index: {}]
  %s5 = inlined_call_operand.<no memory space> [shape: f32[1,1], index: 5, kind: input, shape index: {}]
  %s6 = inlined_call_operand.hbm [shape: f32[1,8], index: 6, kind: output, shape index: {}]
  %s7 = sld [smem:[#allocation0]]
  $region42: #{tpu_custom_call.1} parent=0
    _
  %s9 = ssub.s32 1, %s7
  %s10 = scalar_select 0, %s9, %s7
  %11 = sst [smem:[#allocation4]] %s5
  $region1: #{tpu_custom_call.1} parent=0
    #allocation5 [shape = 'u8[65536]{0}', space=vmem, size = 0x10000, scoped, tag = 'input window, operand 2, single buffered']
    #allocation6 [shape = 's32[1]{0}', space=sflag, size = 0x4, scoped, tag = 'scoped memory for tpu_custom_call.1']
    #allocation7 [shape = 's32[1]{0}', space=sflag, size = 0x4, scoped, tag = 'scoped memory for tpu_custom_call.1']
    #allocation8 [shape = 'u8[512]{0}', space=vmem, size = 0x400, scoped, tag = 'output window, operand 0, single buffered']
    %12 = vsyncpa [#allocation6], 0
    %13 = vsyncpa [#allocation7], 0
    // Predicated region
    $region2: #{tpu_custom_call.1} parent=1 // pred_check
      _
    $region3: #{tpu_custom_call.1} parent=1 // pred_check_branch
      %15 = sbr.rel (0) target = $region5
    $region4: #{tpu_custom_call.1} parent=1 // pred_region
      _
    $region5: #{tpu_custom_call.1} parent=1 // pred_fallthru
      _
    // Predicated region
    $region6: #{tpu_custom_call.1} parent=1 // pred_check
      _
    $region7: #{tpu_custom_call.1} parent=1 // pred_check_branch
      %17 = sbr.rel (0) target = $region9
    $region8: #{tpu_custom_call.1} parent=1 // pred_region
      _
    $region9: #{tpu_custom_call.1} parent=1 // pred_fallthru
      _
    // Predicated region
    $region10: #{tpu_custom_call.1} parent=1 // pred_check
      _
    $region11: #{tpu_custom_call.1} parent=1 // pred_check_branch
      %19 = sbr.rel (0) target = $region13
    $region12: #{tpu_custom_call.1} parent=1 // pred_region
      %21 = vsyncadd [#allocation6], 0
      %s22 = sshll.u32 %s2, 4
      %s23 = int_to_ptr.hbm [resolvable:$true] %s22
      %s24 = sshll.u32 [#allocation5], 4
      %s25 = int_to_ptr.vmem [resolvable:$true] %s24
      %30 = dma.hbm_to_vmem [thread:$0]  %s23, 2048, %s25, [#allocation6], 128, 128, 8
    $region13: #{tpu_custom_call.1} parent=1 // pred_fallthru
      _
    // Predicated region
    $region14: #{tpu_custom_call.1} parent=1 // pred_check
      _
    $region15: #{tpu_custom_call.1} parent=1 // pred_check_branch
      %32 = sbr.rel (0) target = $region17
    $region16: #{tpu_custom_call.1} parent=1 // pred_region
      _
    $region17: #{tpu_custom_call.1} parent=1 // pred_fallthru
      _
    // Predicated region
    $region18: #{tpu_custom_call.1} parent=1 // pred_check
      _
    $region19: #{tpu_custom_call.1} parent=1 // pred_check_branch
      %34 = sbr.rel (0) target = $region21
    $region20: #{tpu_custom_call.1} parent=1 // pred_region
      _
    $region21: #{tpu_custom_call.1} parent=1 // pred_fallthru
      _
    // Predicated region
    $region22: #{tpu_custom_call.1} parent=1 // pred_check
      _
    $region23: #{tpu_custom_call.1} parent=1 // pred_check_branch
      %36 = sbr.rel (0) target = $region25
    $region24: #{tpu_custom_call.1} parent=1 // pred_region
      _
    $region25: #{tpu_custom_call.1} parent=1 // pred_fallthru
      _
    // Predicated region
    $region26: #{tpu_custom_call.1} parent=1 // pred_check
      _
    $region27: #{tpu_custom_call.1} parent=1 // pred_check_branch
      %38 = sbr.rel (0) target = $region29
    $region28: #{tpu_custom_call.1} parent=1 // pred_region
      %40 = dma.done [#allocation6], 2048
    $region29: #{tpu_custom_call.1} parent=1 // pred_fallthru
      _
    %p41 = scmp.eq.s32.totalorder 0, 0
    // Predicated region
    $region30: #{tpu_custom_call.1} parent=1 // pred_check
      %p42 = pneg %p41
    $region31: #{tpu_custom_call.1} parent=1 // pred_check_branch
      %44 = sbr.rel (%p42) target = $region33
    $region32: #{tpu_custom_call.1} parent=1 // pred_region
      %45 = vst [vmem:[#allocation2] sm:$0x1] 0.0
    $region33: #{tpu_custom_call.1} parent=1 // pred_fallthru
      _
    %v46 = vld [vmem:[%s0] sm:$0xff]
    %v47 = vld [vmem:[%s1] sm:$0xf]
    %v48 = vld [vmem:[%s3] sm:$0x1]
    %v50 = vperm.slane %v48, 0
    %vm52 = vcmask 31744
    %v54 = vsel %vm52, %v46, 0
    %vm56 = vcmask 1043456
    %v58 = vsel %vm56, %v47, 0
    %60 = vmatpush.msra.mxu0 0.0
    %61 = vmatpush.msra.mxu0 0.0
    %62 = vmatpush.msra.mxu0 0.0
    %63 = vmatpush.msra.mxu0 0.0
    %64 = vmatpush.msra.mxu0 0.0
    %65 = vmatpush.msra.mxu0 0.0
    %66 = vmatpush.msra.mxu0 0.0
    %67 = vmatpush.msra.mxu0 0.0
    %68 = vmatpush.msra.mxu0 0.0
    %69 = vmatpush.msra.mxu0 0.0
    %70 = vmatpush.msra.mxu0 0.0
    %71 = vmatpush.msra.mxu0 0.0
    %72 = vmatpush.msra.mxu0 0.0
    %73 = vmatpush.msra.mxu0 0.0
    %74 = vmatpush.msra.mxu0 0.0
    %75 = vmatpush.msra.mxu0 %v58
    %76 = vmatmul.f32.gmra.mxu0 %v54
    %v77 = vpop.f32.mrf.mxu0
    %v78 = vadd.f32 %v50, %v77
    %79 = vdwg.mxu0
    %80 = vst [vmem:[#allocation3] sm:$0xff] %v78
    %v81 = vld [vmem:[#allocation5] sm:$0xff]
    %v82 = vld [vmem:[#allocation5 + $0x8] sm:$0xff]
    %v83 = vld [vmem:[#allocation5 + $0x10] sm:$0xff]
    %v84 = vld [vmem:[#allocation5 + $0x18] sm:$0xff]
    %v85 = vld [vmem:[#allocation5 + $0x20] sm:$0xff]
    %v86 = vld [vmem:[#allocation5 + $0x28] sm:$0xff]
    %v87 = vld [vmem:[#allocation5 + $0x30] sm:$0xff]
    %v88 = vld [vmem:[#allocation5 + $0x38] sm:$0xff]
    %v89 = vld [vmem:[#allocation5 + $0x40] sm:$0xff]
    %v90 = vld [vmem:[#allocation5 + $0x48] sm:$0xff]
    %v91 = vld [vmem:[#allocation5 + $0x50] sm:$0xff]
    %v92 = vld [vmem:[#allocation5 + $0x58] sm:$0xff]
    %v93 = vld [vmem:[#allocation5 + $0x60] sm:$0xff]
    %v94 = vld [vmem:[#allocation5 + $0x68] sm:$0xff]
    %v95 = vld [vmem:[#allocation5 + $0x70] sm:$0xff]
    %v96 = vld [vmem:[#allocation5 + $0x78] sm:$0xff]
    %v97 = vld [vmem:[#allocation2] sm:$0x1]
    %v98 = vld [vmem:[#allocation3] sm:$0xff]
    %99 = vmatpush.msra.mxu0 %v96
    %100 = vmatpush.msra.mxu0 %v95
    %101 = vmatpush.msra.mxu0 %v94
    %102 = vmatpush.msra.mxu0 %v93
    %103 = vmatpush.msra.mxu0 %v92
    %104 = vmatpush.msra.mxu0 %v91
    %105 = vmatpush.msra.mxu0 %v90
    %106 = vmatpush.msra.mxu0 %v89
    %107 = vmatpush.msra.mxu0 %v88
    %108 = vmatpush.msra.mxu0 %v87
    %109 = vmatpush.msra.mxu0 %v86
    %110 = vmatpush.msra.mxu0 %v85
    %111 = vmatpush.msra.mxu0 %v84
    %112 = vmatpush.msra.mxu0 %v83
    %113 = vmatpush.msra.mxu0 %v82
    %114 = vmatpush.msra.mxu0 %v81
    %115 = vmatmul.f32.gmra.mxu0 %v97
    %v116 = vpop.f32.mrf.mxu0
    %v117 = vadd.f32 0.0, %v116
    %118 = vdwg.mxu0
    %v119 = vadd.f32 %v98, %v117
    %v120 = vtanh.pop %v119
    %121 = vmatpush.msra.mxu0 %v96
    %122 = vmatpush.msra.mxu0 %v95
    %123 = vmatpush.msra.mxu0 %v94
    %124 = vmatpush.msra.mxu0 %v93
    %125 = vmatpush.msra.mxu0 %v92
    %126 = vmatpush.msra.mxu0 %v91
    %127 = vmatpush.msra.mxu0 %v90
    %128 = vmatpush.msra.mxu0 %v89
    %129 = vmatpush.msra.mxu0 %v88
    %130 = vmatpush.msra.mxu0 %v87
    %131 = vmatpush.msra.mxu0 %v86
    %132 = vmatpush.msra.mxu0 %v85
    %133 = vmatpush.msra.mxu0 %v84
    %134 = vmatpush.msra.mxu0 %v83
    %135 = vmatpush.msra.mxu0 %v82
    %136 = vmatpush.msra.mxu0 %v81
    %137 = vmatmul.f32.gmra.mxu0 %v120
    %v138 = vpop.f32.mrf.mxu0
    %v139 = vadd.f32 0.0, %v138
    %140 = vdwg.mxu0
    %v142 = vrot.slane %v139, 7
    %v144 = vadd.f32 %v98, %v142
    %v145 = vtanh.pop %v144
    %v147 = vrot.slane %v145, 1
    %149 = vmatpush.msra.mxu0 %v96
    %150 = vmatpush.msra.mxu0 %v95
    %151 = vmatpush.msra.mxu0 %v94
    %152 = vmatpush.msra.mxu0 %v93
    %153 = vmatpush.msra.mxu0 %v92
    %154 = vmatpush.msra.mxu0 %v91
    %155 = vmatpush.msra.mxu0 %v90
    %156 = vmatpush.msra.mxu0 %v89
    %157 = vmatpush.msra.mxu0 %v88
    %158 = vmatpush.msra.mxu0 %v87
    %159 = vmatpush.msra.mxu0 %v86
    %160 = vmatpush.msra.mxu0 %v85
    %161 = vmatpush.msra.mxu0 %v84
    %162 = vmatpush.msra.mxu0 %v83
    %163 = vmatpush.msra.mxu0 %v82
    %164 = vmatpush.msra.mxu0 %v81
    %165 = vmatmul.f32.gmra.mxu0 %v147
    %v166 = vpop.f32.mrf.mxu0
    %v167 = vadd.f32 0.0, %v166
    %168 = vdwg.mxu0
    %v170 = vrot.slane %v167, 6
    %v172 = vadd.f32 %v98, %v170
    %v173 = vtanh.pop %v172
    %v175 = vrot.slane %v173, 2
    %177 = vmatpush.msra.mxu0 %v96
    %178 = vmatpush.msra.mxu0 %v95
    %179 = vmatpush.msra.mxu0 %v94
    %180 = vmatpush.msra.mxu0 %v93
    %181 = vmatpush.msra.mxu0 %v92
    %182 = vmatpush.msra.mxu0 %v91
    %183 = vmatpush.msra.mxu0 %v90
    %184 = vmatpush.msra.mxu0 %v89
    %185 = vmatpush.msra.mxu0 %v88
    %186 = vmatpush.msra.mxu0 %v87
    %187 = vmatpush.msra.mxu0 %v86
    %188 = vmatpush.msra.mxu0 %v85
    %189 = vmatpush.msra.mxu0 %v84
    %190 = vmatpush.msra.mxu0 %v83
    %191 = vmatpush.msra.mxu0 %v82
    %192 = vmatpush.msra.mxu0 %v81
    %193 = vmatmul.f32.gmra.mxu0 %v175
    %v194 = vpop.f32.mrf.mxu0
    %v195 = vadd.f32 0.0, %v194
    %196 = vdwg.mxu0
    %v198 = vrot.slane %v195, 5
    %v200 = vadd.f32 %v98, %v198
    %v201 = vtanh.pop %v200
    %v203 = vrot.slane %v201, 3
    %205 = vmatpush.msra.mxu0 %v96
    %206 = vmatpush.msra.mxu0 %v95
    %207 = vmatpush.msra.mxu0 %v94
    %208 = vmatpush.msra.mxu0 %v93
    %209 = vmatpush.msra.mxu0 %v92
    %210 = vmatpush.msra.mxu0 %v91
    %211 = vmatpush.msra.mxu0 %v90
    %212 = vmatpush.msra.mxu0 %v89
    %213 = vmatpush.msra.mxu0 %v88
    %214 = vmatpush.msra.mxu0 %v87
    %215 = vmatpush.msra.mxu0 %v86
    %216 = vmatpush.msra.mxu0 %v85
    %217 = vmatpush.msra.mxu0 %v84
    %218 = vmatpush.msra.mxu0 %v83
    %219 = vmatpush.msra.mxu0 %v82
    %220 = vmatpush.msra.mxu0 %v81
    %221 = vmatmul.f32.gmra.mxu0 %v203
    %v222 = vpop.f32.mrf.mxu0
    %v223 = vadd.f32 0.0, %v222
    %224 = vdwg.mxu0
    %v226 = vrot.slane %v223, 4
    %v228 = vadd.f32 %v98, %v226
    %v229 = vtanh.pop %v228
    %v231 = vrot.slane %v229, 4
    %233 = vmatpush.msra.mxu0 %v96
    %234 = vmatpush.msra.mxu0 %v95
    %235 = vmatpush.msra.mxu0 %v94
    %236 = vmatpush.msra.mxu0 %v93
    %237 = vmatpush.msra.mxu0 %v92
    %238 = vmatpush.msra.mxu0 %v91
    %239 = vmatpush.msra.mxu0 %v90
    %240 = vmatpush.msra.mxu0 %v89
    %241 = vmatpush.msra.mxu0 %v88
    %242 = vmatpush.msra.mxu0 %v87
    %243 = vmatpush.msra.mxu0 %v86
    %244 = vmatpush.msra.mxu0 %v85
    %245 = vmatpush.msra.mxu0 %v84
    %246 = vmatpush.msra.mxu0 %v83
    %247 = vmatpush.msra.mxu0 %v82
    %248 = vmatpush.msra.mxu0 %v81
    %249 = vmatmul.f32.gmra.mxu0 %v231
    %v250 = vpop.f32.mrf.mxu0
    %v251 = vadd.f32 0.0, %v250
    %252 = vdwg.mxu0
    %v254 = vrot.slane %v251, 3
    %v256 = vadd.f32 %v98, %v254
    %v257 = vtanh.pop %v256
    %v259 = vrot.slane %v257, 5
    %261 = vmatpush.msra.mxu0 %v96
    %262 = vmatpush.msra.mxu0 %v95
    %263 = vmatpush.msra.mxu0 %v94
    %264 = vmatpush.msra.mxu0 %v93
    %265 = vmatpush.msra.mxu0 %v92
    %266 = vmatpush.msra.mxu0 %v91
    %267 = vmatpush.msra.mxu0 %v90
    %268 = vmatpush.msra.mxu0 %v89
    %269 = vmatpush.msra.mxu0 %v88
    %270 = vmatpush.msra.mxu0 %v87
    %271 = vmatpush.msra.mxu0 %v86
    %272 = vmatpush.msra.mxu0 %v85
    %273 = vmatpush.msra.mxu0 %v84
    %274 = vmatpush.msra.mxu0 %v83
    %275 = vmatpush.msra.mxu0 %v82
    %276 = vmatpush.msra.mxu0 %v81
    %277 = vmatmul.f32.gmra.mxu0 %v259
    %v278 = vpop.f32.mrf.mxu0
    %v279 = vadd.f32 0.0, %v278
    %280 = vdwg.mxu0
    %v282 = vrot.slane %v279, 2
    %v284 = vadd.f32 %v98, %v282
    %v285 = vtanh.pop %v284
    %v287 = vrot.slane %v285, 6
    %289 = vmatpush.msra.mxu0 %v96
    %290 = vmatpush.msra.mxu0 %v95
    %291 = vmatpush.msra.mxu0 %v94
    %292 = vmatpush.msra.mxu0 %v93
    %293 = vmatpush.msra.mxu0 %v92
    %294 = vmatpush.msra.mxu0 %v91
    %295 = vmatpush.msra.mxu0 %v90
    %296 = vmatpush.msra.mxu0 %v89
    %297 = vmatpush.msra.mxu0 %v88
    %298 = vmatpush.msra.mxu0 %v87
    %299 = vmatpush.msra.mxu0 %v86
    %300 = vmatpush.msra.mxu0 %v85
    %301 = vmatpush.msra.mxu0 %v84
    %302 = vmatpush.msra.mxu0 %v83
    %303 = vmatpush.msra.mxu0 %v82
    %304 = vmatpush.msra.mxu0 %v81
    %305 = vmatmul.f32.gmra.mxu0 %v287
    %v306 = vpop.f32.mrf.mxu0
    %v307 = vadd.f32 0.0, %v306
    %308 = vdwg.mxu0
    %v310 = vrot.slane %v307, 1
    %v312 = vadd.f32 %v98, %v310
    %v313 = vtanh.pop %v312
    %vm314 = vcmask 1040384
    %v315 = vsel %vm314, %v120, %v145
    %vm316 = vcmask 1041408
    %v317 = vsel %vm316, %v315, %v173
    %vm318 = vcmask 1042432
    %v319 = vsel %vm318, %v317, %v201
    %v320 = vsel %vm56, %v319, %v229
    %vm321 = vcmask 1044480
    %v322 = vsel %vm321, %v320, %v257
    %vm323 = vcmask 1045504
    %v324 = vsel %vm323, %v322, %v285
    %vm325 = vcmask 1046528
    %v326 = vsel %vm325, %v324, %v313
    %327 = vst [vmem:[#allocation3] sm:$0xff] %v326
    %328 = vst [vmem:[#allocation2 - $0x7] sm:$0x80] %v313
    %v329 = vld [vmem:[%s4] sm:$0x1]
    %v330 = vld [vmem:[#allocation3] sm:$0xff]
    %s331 = sld [smem:[#allocation4]]
    %v332 = vstv %s331
    %333 = vmatpush.xpose.msra.mxu0 0.0
    %334 = vmatpush.xpose.msra.mxu0 0.0
    %335 = vmatpush.xpose.msra.mxu0 0.0
    %336 = vmatpush.xpose.msra.mxu0 0.0
    %337 = vmatpush.xpose.msra.mxu0 0.0
    %338 = vmatpush.xpose.msra.mxu0 0.0
    %339 = vmatpush.xpose.msra.mxu0 0.0
    %340 = vmatpush.xpose.msra.mxu0 0.0
    %341 = vmatpush.xpose.msra.mxu0 0.0
    %342 = vmatpush.xpose.msra.mxu0 0.0
    %343 = vmatpush.xpose.msra.mxu0 0.0
    %344 = vmatpush.xpose.msra.mxu0 0.0
    %345 = vmatpush.xpose.msra.mxu0 0.0
    %346 = vmatpush.xpose.msra.mxu0 0.0
    %347 = vmatpush.xpose.msra.mxu0 0.0
    %348 = vmatpush.xpose.msra.mxu0 %v330
    %349 = vmatmul.f32.gmra.mxu0 %v329
    %v350 = vpop.f32.mrf.mxu0
    %v351 = vadd.f32 %v332, %v350
    %352 = vdwg.mxu0
    %v353 = vxor.u32 %v351, 2147483648
    %v354 = vmul.f32 %v353, 1.442695
    %v355 = vpow.pop %v354
    %v356 = vadd.f32 %v355, 1.0
    %v357 = vrcp.pop %v356
    %v358 = vmul.f32 %v356, %v357
    %v359 = vsub.f32 1.0, %v358
    %v360 = vmul.f32 %v357, %v359
    %v361 = vadd.f32 %v357, %v360
    %vm362 = vweird.f32 %v356
    %vm363 = vweird.f32 %v357
    %vm364 = vmor %vm362, %vm363
    %v365 = vsel %vm364, %v357, %v361
    %v366 = vand.u32 2147483647, %v356
    %vm367 = vcmp.eq.f32.partialorder %v366, 8.507059e+37
    %v368 = vand.u32 %v356, 2147483648
    %v369 = vor.u32 1.1754944e-38, %v368
    %v370 = vsel %vm367, %v369, %v365
    %v371 = vmul.f32 1.0, %v370
    %vm372 = vcmask 57344
    %373 = vst.msk [vmem:[#allocation8] sm:$0x1] %vm372, %v371
    // Predicated region
    $region34: #{tpu_custom_call.1} parent=1 // pred_check
      _
    $region35: #{tpu_custom_call.1} parent=1 // pred_check_branch
      %375 = sbr.rel (0) target = $region37
    $region36: #{tpu_custom_call.1} parent=1 // pred_region
      %377 = vsyncadd [#allocation7], 0
      %s379 = sshll.u32 [#allocation8], 4
      %s380 = int_to_ptr.vmem [resolvable:$true] %s379
      %s381 = sshll.u32 %s6, 4
      %s382 = int_to_ptr.hbm [resolvable:$true] %s381
      %384 = dma.vmem_to_hbm [thread:$0]  %s380, 16, %s382, [#allocation7]
    $region37: #{tpu_custom_call.1} parent=1 // pred_fallthru
      _
    // Predicated region
    $region38: #{tpu_custom_call.1} parent=1 // pred_check
      _
    $region39: #{tpu_custom_call.1} parent=1 // pred_check_branch
      %386 = sbr.rel (0) target = $region41
    $region40: #{tpu_custom_call.1} parent=1 // pred_region
      %388 = dma.done [#allocation7], 16
    $region41: #{tpu_custom_call.1} parent=1 // pred_fallthru
      _
    %389 = vsyncpa [#allocation6], 1
    %390 = vsyncpa [#allocation7], 1

</llo_original>
